<compile_context>
chip_gen: v6e
topology: v6e:2x2x1
jax: 0.10.0
libtpu: 0.0.40
codegen_flags: <defaults>
</compile_context>

<pallas_src>
import functools

import jax
import jax.numpy as jnp
from jax.experimental import pallas as pl
from jax.experimental.pallas import tpu as pltpu

_LANE = 128
_MAX_TILE_ROWS = 2048   # ~1 MiB f32 per input block
_NUM_SPLITS = 2         # v7x has 2 TensorCores; harmless (sequential) elsewhere


def _round_up(x, m):
    return (x + m - 1) // m * m


def _rmse_sumsq_kernel(yhat_ref, y_ref, out_ref, acc_ref, *,
                       tile_rows, tiles_per_split, valid_rows):
    c = pl.program_id(0)   # core-split axis ("parallel")
    i = pl.program_id(1)   # reduction axis ("arbitrary")

    @pl.when(i == 0)
    def _init():
        acc_ref[...] = jnp.zeros_like(acc_ref)

    d = yhat_ref[...].astype(jnp.float32) - y_ref[...].astype(jnp.float32)
    dd = d * d

    # Zero contributions from rows past the end of the data: the trailing
    # partial tile and any clamped (duplicate) tiles on the core-split axis.
    tile_idx = c * tiles_per_split + i
    row = tile_idx * tile_rows + jax.lax.broadcasted_iota(
        jnp.int32, (tile_rows, 1), 0)
    dd = jnp.where(row < valid_rows, dd, 0.0)

    # Keep the running sum vreg-shaped: per-step work is only VPU adds; the
    # cross-lane/sublane XLU reduce happens once, in the finalize step.
    acc_ref[...] += jnp.sum(dd.reshape(tile_rows // 8, 8, _LANE), axis=0)

    @pl.when(i == pl.num_programs(1) - 1)
    def _finalize():
        out_ref[0, 0] = jnp.sum(acc_ref[...])


def rmse_loss(yhat, y):
    """sqrt(mean((yhat - y) ** 2)) over all elements — torch.sqrt(MSELoss)."""
    assert yhat.shape == y.shape, "yhat and y must have identical shapes"
    n_total = int(yhat.size)

    # Sub-32-bit dtypes pack along sublanes; keep row counts a multiple of the
    # packed sublane count so blocks stay layout-native.
    itemsize = jnp.dtype(yhat.dtype).itemsize
    sublane = max(8, 32 // max(itemsize, 1))   # 8 f32, 16 bf16, 32 int8/fp8

    yf = yhat.reshape(-1)
    tf = y.reshape(-1)

    # Pad (only when misaligned) up to a multiple of sublane*128 so the data
    # reshapes to a lane-dense (rows, 128) slab with rows % sublane == 0.
    # Both sides are zero-padded identically, so padded elements contribute
    # (0 - 0)^2 = 0 to the accumulated sum.
    chunk = sublane * _LANE
    padded = _round_up(n_total, chunk)
    if padded != n_total:
        yf = jnp.pad(yf, (0, padded - n_total))
        tf = jnp.pad(tf, (0, padded - n_total))
    rows = padded // _LANE
    yf = yf.reshape(rows, _LANE)
    tf = tf.reshape(rows, _LANE)

    tile_rows = min(_MAX_TILE_ROWS, rows)
    n_tiles = pl.cdiv(rows, tile_rows)

    # Split the reduction across (up to) two TensorCores; each split produces
    # a partial sum-of-squares that the wrapper combines.
    num_splits = _NUM_SPLITS if n_tiles >= _NUM_SPLITS else 1
    tiles_per_split = pl.cdiv(n_tiles, num_splits)
    last_tile = n_tiles - 1

    def in_map(c, i):
        # Clamp so a ragged split never indexes past the last tile; clamped
        # (duplicate) tiles are masked to zero inside the kernel.
        return (jnp.minimum(c * tiles_per_split + i, last_tile), 0)

    kernel = functools.partial(
        _rmse_sumsq_kernel,
        tile_rows=tile_rows,
        tiles_per_split=tiles_per_split,
        valid_rows=rows,
    )

    partial = pl.pallas_call(
        kernel,
        out_shape=jax.ShapeDtypeStruct((num_splits, 1), jnp.float32),
        grid_spec=pltpu.PrefetchScalarGridSpec(
            num_scalar_prefetch=0,
            grid=(num_splits, tiles_per_split),
            in_specs=[
                pl.BlockSpec((tile_rows, _LANE), in_map),
                pl.BlockSpec((tile_rows, _LANE), in_map),
            ],
            out_specs=pl.BlockSpec(
                (1, 1), lambda c, i: (c, 0),
                memory_space=pltpu.MemorySpace.SMEM,
            ),
            scratch_shapes=[pltpu.VMEM((8, _LANE), jnp.float32)],
        ),
        compiler_params=pltpu.CompilerParams(
            dimension_semantics=("parallel", "arbitrary"),
        ),
    )(yf, tf)

    return jnp.sqrt(jnp.sum(partial) / jnp.float32(n_total))


if __name__ == "__main__":
    key = jax.random.PRNGKey(0)

    def check(k, shape):
        k1, k2 = jax.random.split(k)
        yhat = jax.random.normal(k1, shape, dtype=jnp.float32)
        y = jax.random.normal(k2, shape, dtype=jnp.float32)
        loss = rmse_loss(yhat, y)
        jax.block_until_ready(loss)
        ref = jnp.sqrt(jnp.mean((yhat - y) ** 2))
        assert jnp.allclose(loss, ref, rtol=1e-4, atol=1e-6), (shape, loss, ref)

    keys = jax.random.split(key, 3)
    # Primary small case (generic prediction/target pair).
    check(keys[0], (2, 4, 16, 16))
    # Misaligned element count -> zero-pad tail path.
    check(keys[1], (3, 5, 7, 11))
    # Larger case -> multiple tiles, two-way core split, partial edge tile.
    check(keys[2], (2, 4, 256, 130))

    print("KERNEL_OK")
</pallas_src>

<mosaic_0001>
module attributes {stable_mosaic.version = 11 : i64} {
  func.func @_rmse_sumsq_kernel(%arg0: i32, %arg1: i32, %arg2: memref<16x128xf32, #tpu.memory_space<vmem>>, %arg3: memref<16x128xf32, #tpu.memory_space<vmem>>, %arg4: memref<1x1xf32, #tpu.memory_space<smem>>, %arg5: memref<8x128xf32, #tpu.memory_space<vmem>>) attributes {dimension_semantics = [#tpu.dimension_semantics<parallel>, #tpu.dimension_semantics<arbitrary>], iteration_bounds = array<i64: 1, 1>, scalar_prefetch = 0 : i64, scratch_operands = 1 : i64, tpu.core_type = #tpu.core_type<tc>, window_params = [{transform_indices = @transform_0, window_bounds = array<i64: 16, 128>}, {transform_indices = @transform_1, window_bounds = array<i64: 16, 128>}, {transform_indices = @transform_2, window_bounds = array<i64: 1, 1>}]} {
    %c0_i32 = arith.constant 0 : i32
    %0 = arith.cmpi eq, %arg1, %c0_i32 : i32
    %1 = arith.extui %0 : i1 to i32
    %c0_i32_0 = arith.constant 0 : i32
    %2 = arith.cmpi ne, %1, %c0_i32_0 : i32
    scf.if %2 {
      %cst_12 = arith.constant 0.000000e+00 : f32
      %27 = vector.broadcast %cst_12 : f32 to vector<8x128xf32>
      %c0_13 = arith.constant 0 : index
      %c0_14 = arith.constant 0 : index
      %28 = vector.load %arg5[%c0_13, %c0_14] : memref<8x128xf32, #tpu.memory_space<vmem>>, vector<8x128xf32>
      tpu.vector_store %arg5[%c0_13, %c0_14], %27 {strides = array<i32>} : memref<8x128xf32, #tpu.memory_space<vmem>>, vector<8x128xf32>,
    } else {
    }
    %c0 = arith.constant 0 : index
    %c0_1 = arith.constant 0 : index
    %3 = vector.load %arg2[%c0, %c0_1] : memref<16x128xf32, #tpu.memory_space<vmem>>, vector<16x128xf32>
    %c0_2 = arith.constant 0 : index
    %c0_3 = arith.constant 0 : index
    %4 = vector.load %arg3[%c0_2, %c0_3] : memref<16x128xf32, #tpu.memory_space<vmem>>, vector<16x128xf32>
    %5 = arith.subf %3, %4 : vector<16x128xf32>
    %6 = arith.mulf %5, %5 : vector<16x128xf32>
    %c1_i32 = arith.constant 1 : i32
    %7 = arith.muli %arg0, %c1_i32 : i32
    %8 = arith.addi %7, %arg1 : i32
    %c16_i32 = arith.constant 16 : i32
    %9 = arith.muli %8, %c16_i32 : i32
    %10 = tpu.iota {dimensions = array<i32: 0>} : vector<16x1xi32>
    %11 = vector.broadcast %9 : i32 to vector<16x1xi32>
    %12 = arith.addi %11, %10 : vector<16x1xi32>
    %c16_i32_4 = arith.constant 16 : i32
    %13 = vector.broadcast %c16_i32_4 : i32 to vector<16x1xi32>
    %14 = arith.cmpi slt, %12, %13 : vector<16x1xi32>
    %cst = arith.constant 0.000000e+00 : f32
    %15 = vector.shape_cast %14 : vector<16x1xi1> to vector<16x1xi1>
    %16 = vector.broadcast %15 : vector<16x1xi1> to vector<16x128xi1>
    %17 = vector.broadcast %cst : f32 to vector<16x128xf32>
    %18 = arith.select %16, %6, %17 : vector<16x128xi1>, vector<16x128xf32>
    %c0_5 = arith.constant 0 : index
    %c0_6 = arith.constant 0 : index
    %19 = vector.load %arg5[%c0_5, %c0_6] : memref<8x128xf32, #tpu.memory_space<vmem>>, vector<8x128xf32>
    %20 = vector.shape_cast %18 : vector<16x128xf32> to vector<2x8x128xf32>
    %cst_7 = arith.constant dense<0.000000e+00> : vector<8x128xf32>
    %21 = vector.multi_reduction <add>, %20, %cst_7 [0] : vector<2x8x128xf32> to vector<8x128xf32>
    %22 = arith.addf %19, %21 : vector<8x128xf32>
    %c0_8 = arith.constant 0 : index
    %c0_9 = arith.constant 0 : index
    %23 = vector.load %arg5[%c0_8, %c0_9] : memref<8x128xf32, #tpu.memory_space<vmem>>, vector<8x128xf32>
    tpu.vector_store %arg5[%c0_8, %c0_9], %22 {strides = array<i32>} : memref<8x128xf32, #tpu.memory_space<vmem>>, vector<8x128xf32>,
    %c0_i32_10 = arith.constant 0 : i32
    %24 = arith.cmpi eq, %arg1, %c0_i32_10 : i32
    %25 = arith.extui %24 : i1 to i32
    %c0_i32_11 = arith.constant 0 : i32
    %26 = arith.cmpi ne, %25, %c0_i32_11 : i32
    scf.if %26 {
      %c0_12 = arith.constant 0 : index
      %c0_13 = arith.constant 0 : index
      %27 = vector.load %arg5[%c0_12, %c0_13] : memref<8x128xf32, #tpu.memory_space<vmem>>, vector<8x128xf32>
      %28 = vector.shape_cast %27 : vector<8x128xf32> to vector<1x8x128xf32>
      %cst_14 = arith.constant dense<0.000000e+00> : vector<1xf32>
      %29 = vector.multi_reduction <add>, %28, %cst_14 [1, 2] : vector<1x8x128xf32> to vector<1xf32>
      %30 = vector.shape_cast %29 : vector<1xf32> to vector<1x1x1xf32>
      %31 = vector.extract %30[0, 0, 0] : f32 from vector<1x1x1xf32>
      %c0_15 = arith.constant 0 : index
      %c0_16 = arith.constant 0 : index
      %32 = memref.load %arg4[%c0_15, %c0_16] : memref<1x1xf32, #tpu.memory_space<smem>>
      memref.store %31, %arg4[%c0_15, %c0_16] : memref<1x1xf32, #tpu.memory_space<smem>>
    } else {
    }
    return
  }
  func.func @transform_0(%arg0: i32, %arg1: i32) -> (i32, i32) {
    %c1_i32 = arith.constant 1 : i32
    %0 = arith.muli %arg0, %c1_i32 : i32
    %1 = arith.addi %0, %arg1 : i32
    %c0_i32 = arith.constant 0 : i32
    %2 = arith.minsi %1, %c0_i32 : i32
    %c0_i32_0 = arith.constant 0 : i32
    %c0_i32_1 = arith.constant 0 : i32
    return %2, %c0_i32_0 : i32, i32
  }
  func.func @transform_1(%arg0: i32, %arg1: i32) -> (i32, i32) {
    %c1_i32 = arith.constant 1 : i32
    %0 = arith.muli %arg0, %c1_i32 : i32
    %1 = arith.addi %0, %arg1 : i32
    %c0_i32 = arith.constant 0 : i32
    %2 = arith.minsi %1, %c0_i32 : i32
    %c0_i32_0 = arith.constant 0 : i32
    %c0_i32_1 = arith.constant 0 : i32
    return %2, %c0_i32_0 : i32, i32
  }
  func.func @transform_2(%arg0: i32, %arg1: i32) -> (i32, i32) {
    %c0_i32 = arith.constant 0 : i32
    %c0_i32_0 = arith.constant 0 : i32
    return %arg0, %c0_i32 : i32, i32
  }
}

</mosaic_0001>

<llo_original>
// kernel: tpu_custom_call.1
$region0: #{tpu_custom_call.1}
  #allocation0 [shape = 'u32[]', space=smem, size = 0x4, offset = 0x4, fixed_abs, tag = 'smem constant byte address 0x4 - core index']
  #allocation1 [shape = 'u32[144,128]{1,0:T(1,128)}', space=vmem, size = 0x12000, scoped, tag = 'internal scratch']
  #allocation2 [shape = 'f32[8,128]{1,0:T(8,128)}', space=vmem, size = 0x1000, scoped, tag = 'scratch operand']
  %s0 = inlined_call_operand.hbm [shape: f32[16,128], index: 0, kind: input, shape index: {}]
  %s1 = inlined_call_operand.hbm [shape: f32[16,128], index: 1, kind: input, shape index: {}]
  %s2 = inlined_call_operand.hbm [shape: f32[1,1], index: 2, kind: output, shape index: {}]
  %s3 = sld [smem:[#allocation0]]
  $region34: #{tpu_custom_call.1} parent=0
    _
  %s5 = ssub.s32 1, %s3
  %s6 = scalar_select 0, %s5, %s3
  $region1: #{tpu_custom_call.1} parent=0
    #allocation3 [shape = 'u8[8192]{0}', space=vmem, size = 0x2000, scoped, tag = 'input window, operand 0, single buffered']
    #allocation4 [shape = 's32[1]{0}', space=sflag, size = 0x4, scoped, tag = 'scoped memory for tpu_custom_call.1']
    #allocation5 [shape = 's32[1]{0}', space=sflag, size = 0x4, scoped, tag = 'scoped memory for tpu_custom_call.1']
    #allocation6 [shape = 'u8[8192]{0}', space=vmem, size = 0x2000, scoped, tag = 'input window, operand 1, single buffered']
    #allocation7 [shape = 's32[1]{0}', space=sflag, size = 0x4, scoped, tag = 'scoped memory for tpu_custom_call.1']
    #allocation8 [shape = 'u8[512]{0}', space=smem, size = 0x200, scoped, tag = 'output window, operand 0, single buffered']
    %7 = vsyncpa [#allocation4], 0
    %8 = vsyncpa [#allocation7], 0
    %9 = vsyncpa [#allocation5], 0
    // Predicated region
    $region2: #{tpu_custom_call.1} parent=1 // pred_check
      _
    $region3: #{tpu_custom_call.1} parent=1 // pred_check_branch
      %11 = sbr.rel (0) target = $region5
    $region4: #{tpu_custom_call.1} parent=1 // pred_region
      %s12 = sadd.s32 0, 0
      %p13 = scmp.lt.s32.totalorder %s12, 0
      %s14 = scalar_select %p13, %s12, 0
      %s15 = smul.u32 2, %s14
      %s17 = ssub.s32 256, 256
      %18 = vsyncadd [#allocation4], %s17
      %s19 = smul.addr %s15, 128
      %s20 = scalar_lea.hbm %s0, %s19
      %s21 = sshll.u32 [#allocation3], 4
      %s22 = int_to_ptr.vmem [resolvable:$true] %s21
      %27 = dma.hbm_to_vmem [thread:$0]  %s20, 256, %s22, [#allocation4], 128, 128, 8
    $region5: #{tpu_custom_call.1} parent=1 // pred_fallthru
      _
    // Predicated region
    $region6: #{tpu_custom_call.1} parent=1 // pred_check
      _
    $region7: #{tpu_custom_call.1} parent=1 // pred_check_branch
      %29 = sbr.rel (0) target = $region9
    $region8: #{tpu_custom_call.1} parent=1 // pred_region
      %s30 = sadd.s32 0, 0
      %p31 = scmp.lt.s32.totalorder %s30, 0
      %s32 = scalar_select %p31, %s30, 0
      %s33 = smul.u32 2, %s32
      %s35 = ssub.s32 256, 256
      %36 = vsyncadd [#allocation7], %s35
      %s37 = smul.addr %s33, 128
      %s38 = scalar_lea.hbm %s1, %s37
      %s39 = sshll.u32 [#allocation6], 4
      %s40 = int_to_ptr.vmem [resolvable:$true] %s39
      %45 = dma.hbm_to_vmem [thread:$0]  %s38, 256, %s40, [#allocation7], 128, 128, 8
    $region9: #{tpu_custom_call.1} parent=1 // pred_fallthru
      _
    // Predicated region
    $region10: #{tpu_custom_call.1} parent=1 // pred_check
      _
    $region11: #{tpu_custom_call.1} parent=1 // pred_check_branch
      %47 = sbr.rel (0) target = $region13
    $region12: #{tpu_custom_call.1} parent=1 // pred_region
      %48 = dma.done [#allocation4], 256
    $region13: #{tpu_custom_call.1} parent=1 // pred_fallthru
      _
    // Predicated region
    $region14: #{tpu_custom_call.1} parent=1 // pred_check
      _
    $region15: #{tpu_custom_call.1} parent=1 // pred_check_branch
      %50 = sbr.rel (0) target = $region17
    $region16: #{tpu_custom_call.1} parent=1 // pred_region
      %51 = dma.done [#allocation7], 256
    $region17: #{tpu_custom_call.1} parent=1 // pred_fallthru
      _
    %s52 = sadd.s32 0, 0
    %p53 = scmp.lt.s32.totalorder %s52, 0
    %s54 = scalar_select %p53, %s52, 0
    %s55 = smul.u32 2, %s54
    %s56 = sadd.s32 0, 0
    %p57 = scmp.lt.s32.totalorder %s56, 0
    %s58 = scalar_select %p57, %s56, 0
    %s59 = smul.u32 2, %s58
    %p60 = scmp.eq.s32.totalorder 0, 0
    // Predicated region
    $region18: #{tpu_custom_call.1} parent=1 // pred_check
      %p61 = pneg %p60
    $region19: #{tpu_custom_call.1} parent=1 // pred_check_branch
      %63 = sbr.rel (%p61) target = $region21
    $region20: #{tpu_custom_call.1} parent=1 // pred_region
      %64 = vst [vmem:[#allocation2] sm:$0xff] 0.0
    $region21: #{tpu_custom_call.1} parent=1 // pred_fallthru
      _
    %v65 = vld [vmem:[#allocation3] sm:$0xff]
    %v66 = vld [vmem:[#allocation3 + $0x8] sm:$0xff]
    %v67 = vld [vmem:[#allocation6] sm:$0xff]
    %v68 = vld [vmem:[#allocation6 + $0x8] sm:$0xff]
    %v69 = vsub.f32 %v65, %v67
    %v70 = vsub.f32 %v66, %v68
    %v71 = vmul.f32 %v69, %v69
    %v72 = vmul.f32 %v70, %v70
    %s73 = sadd.s32 0, 0
    %s74 = smul.u32 %s73, 16
    %v75 = vlaneseq
    %v76 = vshrl.u32 %v75, 7
    %v77 = vadd.s32 %v76, 8
    %v78 = vstv %s74
    %v79 = vadd.s32 %v78, %v76
    %v80 = vadd.s32 %v78, %v77
    %vm81 = vcmp.lt.s32.totalorder %v79, 16
    %vm82 = vcmp.lt.s32.totalorder %v80, 16
    %v83 = vsel %vm81, 1, 0
    %v84 = vsel %vm82, 1, 0
    %vm85 = vcmp.eq.s32.totalorder %v83, 1
    %vm86 = vcmp.eq.s32.totalorder %v84, 1
    %v87 = vsel %vm85, %v71, 0.0
    %v88 = vsel %vm86, %v72, 0.0
    %v89 = vld [vmem:[#allocation2] sm:$0xff]
    %v90 = vadd.f32 %v87, %v88
    %v91 = vadd.f32 %v89, %v90
    %92 = vst [vmem:[#allocation2] sm:$0xff] %v91
    // Predicated region
    $region22: #{tpu_custom_call.1} parent=1 // pred_check
      %p93 = pneg %p60
    $region23: #{tpu_custom_call.1} parent=1 // pred_check_branch
      %95 = sbr.rel (%p93) target = $region25
    $region24: #{tpu_custom_call.1} parent=1 // pred_region
      %v96 = vld [vmem:[#allocation2] sm:$0xff]
      %97 = vadd.xlane.f32.xlu0 %v96
      %v98 = vpop.xlane.xlu0 %97
      %v99 = vrot.slane %v98, 4
      %v100 = vadd.f32 %v98, %v99
      %v101 = vrot.slane %v100, 2
      %v102 = vadd.f32 %v100, %v101
      %v103 = vrot.slane %v102, 1
      %v104 = vadd.f32 %v102, %v103
      %s105 = vtos %v104
      %s106 = scalar_lea.smem [#allocation8], 0
      %107 = sst [smem:[%s106]] %s105
    $region25: #{tpu_custom_call.1} parent=1 // pred_fallthru
      _
    // Predicated region
    $region26: #{tpu_custom_call.1} parent=1 // pred_check
      _
    $region27: #{tpu_custom_call.1} parent=1 // pred_check_branch
      %109 = sbr.rel (0) target = $region29
    $region28: #{tpu_custom_call.1} parent=1 // pred_region
      %s111 = ssub.s32 16, 16
      %112 = vsyncadd [#allocation5], %s111
      %115 = dma.smem_to_hbm [#allocation8], 16, %s2, [#allocation5]
    $region29: #{tpu_custom_call.1} parent=1 // pred_fallthru
      _
    // Predicated region
    $region30: #{tpu_custom_call.1} parent=1 // pred_check
      _
    $region31: #{tpu_custom_call.1} parent=1 // pred_check_branch
      %117 = sbr.rel (0) target = $region33
    $region32: #{tpu_custom_call.1} parent=1 // pred_region
      %118 = dma.done [#allocation5], 16
    $region33: #{tpu_custom_call.1} parent=1 // pred_fallthru
      _
    %119 = sfence
    %120 = vsyncpa [#allocation4], 1
    %121 = vsyncpa [#allocation7], 1
    %122 = vsyncpa [#allocation5], 1

</llo_original>
